<compile_context>
chip_gen: v7x
topology: tpu7x:2x2x1
jax: 0.10.0
libtpu: 0.0.40
codegen_flags: <defaults>
</compile_context>

<pallas_src>
import numpy as np
import jax
import jax.numpy as jnp
from jax import lax
from jax.experimental import pallas as pl
from jax.experimental.pallas import tpu as pltpu

# Deterministic "parameter" (the 1-D taps the module would be constructed with).
TAPS = np.array([1.0, 4.0, 6.0, 4.0, 1.0], dtype=np.float32) / 16.0  # odd K
K = int(TAPS.size)
PAD = K // 2
# TODO(synk): even-length taps (output length T-1) and the ndim=1/3 module
# variants share the same 1-D time-axis convolution; only the odd-K ndim=2
# path is wired up here.

_MAX_BLOCK_BYTES = 2 << 20      # per-block cap (v7x-safe: I/O double-buffers + temps << 32 MiB)
_VMEM_LIMIT_BYTES = 32 << 20    # > v5e 16 MiB default, == v6e/v7x scoped default


def _pick_rows_per_block(R, TX, itemsize):
    """Rows per block: multiple of the dtype's sublane quantum, block <= cap, and
    (when the data allows) >= 8 grid steps so both v7x TensorCores get >= 4
    pipelined blocks each. No divisibility requirement: the grid is cdiv(R, G)
    and the ragged last block is masked by Pallas (rows are independent)."""
    sub = max(8, 32 // itemsize)                  # 8 (f32) / 16 (bf16) / 32 (i8)
    if R <= sub:
        return R                                  # block dim == full array dim: allowed
    row_bytes = TX * itemsize
    cap = max(sub, (_MAX_BLOCK_BYTES // row_bytes) // sub * sub)
    # TODO(synk): rows wider than the cap (TX*itemsize > _MAX_BLOCK_BYTES/8) would
    # need lane-dim tiling with halos for the rolls; left unsplit here.
    want = pl.cdiv(R, 8)                          # rows/step for ~8 grid steps
    want = max(sub, (want // sub) * sub)          # round down to sublane multiple
    return min(cap, want)


def _make_kernel(TXp, TX_real, X, out_dtype):
    def kernel(x_ref, o_ref):
        xb = x_ref[...]                                       # (G, TXp)
        if xb.dtype != jnp.float32:
            xb = xb.astype(jnp.float32)                       # accumulate in f32
        # Tiny (1, TXp) lane-index row shared by every sublane (flattened t*X + x).
        lane = lax.broadcasted_iota(jnp.int32, (1, TXp), 1)
        out = xb * jnp.float32(float(TAPS[PAD]))              # center tap: no roll/mask
        for m in range(K):
            if m == PAD:
                continue
            d = (PAD - m) * X                                 # static lane shift, multiple of X
            # rolled[., f] = xb[., (f + d) mod TXp]; reads falling outside the real
            # [0, TX_real) window are the conv's zero padding -> weight masked to 0.
            valid = (lane < TX_real - d) if d > 0 else (lane >= -d)
            wmask = jnp.where(valid, jnp.float32(float(TAPS[m])), jnp.float32(0.0))
            rolled = pltpu.roll(xb, shift=(-d) % TXp, axis=1)  # XLU slot (free-ish)
            out = out + rolled * wmask                         # sublane broadcast: 1 mul + 1 add / elem
        o_ref[...] = out.astype(out_dtype)
        # TODO(synk): if a v7x bundle profile ever shows VALU/XLU saturation and
        # T >= 128, reformulate as a banded (T x T) matmul on the idle MXU.

    return kernel


def convolve_kernel_1d(x):
    """x: (B, C, T, X) -> (B, C, T, X) (filtered along T, zero-padded, same length)."""
    B, C, T, X = x.shape
    R, TX = B * C, T * X
    xf = x.reshape(R, TX)                         # contiguous merge: free reshape

    # Lane-dense layout: pad the flattened lane dim up to a multiple of 128 so
    # output stores are unmasked vst (extra pad pass only when TX % 128 != 0).
    TXp = ((TX + 127) // 128) * 128
    if TXp != TX:
        xf = jnp.pad(xf, ((0, 0), (0, TXp - TX)))

    itemsize = x.dtype.itemsize
    G = _pick_rows_per_block(R, TXp, itemsize)

    out = pl.pallas_call(
        _make_kernel(TXp, TX, X, x.dtype),
        out_shape=jax.ShapeDtypeStruct((R, TXp), x.dtype),
        grid_spec=pltpu.PrefetchScalarGridSpec(
            num_scalar_prefetch=0,
            grid=(pl.cdiv(R, G),),
            in_specs=[pl.BlockSpec((G, TXp), lambda i: (i, 0))],
            out_specs=pl.BlockSpec((G, TXp), lambda i: (i, 0)),
        ),
        compiler_params=pltpu.CompilerParams(
            dimension_semantics=("parallel",),
            vmem_limit_bytes=_VMEM_LIMIT_BYTES,
        ),
        cost_estimate=pl.CostEstimate(
            flops=2 * K * R * TXp,
            transcendentals=0,
            bytes_accessed=2 * R * TXp * itemsize,
        ),
    )(xf)

    if TXp != TX:
        out = out[:, :TX]
    return out.reshape(B, C, T, X)


if __name__ == "__main__":
    key = jax.random.PRNGKey(0)
    B, C, T, X = 2, 4, 16, 16
    x = jax.random.normal(key, (B, C, T, X), dtype=jnp.float32)

    y = jax.block_until_ready(convolve_kernel_1d(x))

    # Plain-JAX reference with identical semantics: zero-padded true convolution
    # along T with *un-flipped* taps (what conv_transpose2d scatters).
    xp = jnp.pad(x, ((0, 0), (0, 0), (PAD, PAD), (0, 0)))
    ref = sum(
        jnp.float32(TAPS[m]) * xp[:, :, (2 * PAD - m):(2 * PAD - m) + T, :]
        for m in range(K)
    )

    assert y.shape == (B, C, T, X)
    np.testing.assert_allclose(np.asarray(y), np.asarray(ref), rtol=1e-5, atol=1e-5)
    print("KERNEL_OK")
</pallas_src>

<mosaic_0001>
module attributes {stable_mosaic.version = 11 : i64} {
  func.func @kernel(%arg0: i32, %arg1: memref<8x256xf32, #tpu.memory_space<vmem>>, %arg2: memref<8x256xf32, #tpu.memory_space<vmem>>) attributes {dimension_semantics = [#tpu.dimension_semantics<parallel>], iteration_bounds = array<i64: 1>, scalar_prefetch = 0 : i64, scratch_operands = 0 : i64, tpu.core_type = #tpu.core_type<tc>, window_params = [{transform_indices = @transform_0, window_bounds = array<i64: 8, 256>}, {transform_indices = @transform_1, window_bounds = array<i64: 8, 256>}]} {
    %c0 = arith.constant 0 : index
    %c0_0 = arith.constant 0 : index
    %0 = vector.load %arg1[%c0, %c0_0] : memref<8x256xf32, #tpu.memory_space<vmem>>, vector<8x256xf32>
    %1 = tpu.iota {dimensions = array<i32: 1>} : vector<1x256xi32>
    %cst = arith.constant 3.750000e-01 : f32
    %2 = vector.broadcast %cst : f32 to vector<8x256xf32>
    %3 = arith.mulf %0, %2 : vector<8x256xf32>
    %c224_i32 = arith.constant 224 : i32
    %4 = vector.broadcast %c224_i32 : i32 to vector<1x256xi32>
    %5 = arith.cmpi slt, %1, %4 : vector<1x256xi32>
    %cst_1 = arith.constant 6.250000e-02 : f32
    %cst_2 = arith.constant 0.000000e+00 : f32
    %6 = vector.broadcast %cst_1 : f32 to vector<1x256xf32>
    %7 = vector.broadcast %cst_2 : f32 to vector<1x256xf32>
    %8 = arith.select %5, %6, %7 : vector<1x256xi1>, vector<1x256xf32>
    %c224_i32_3 = arith.constant 224 : i32
    %9 = tpu.dynamic_rotate %0 by %c224_i32_3 dim 1 : vector<8x256xf32>, i32 -> vector<8x256xf32>
    %10 = vector.broadcast %8 : vector<1x256xf32> to vector<8x256xf32>
    %11 = arith.mulf %9, %10 : vector<8x256xf32>
    %12 = arith.addf %3, %11 : vector<8x256xf32>
    %c240_i32 = arith.constant 240 : i32
    %13 = vector.broadcast %c240_i32 : i32 to vector<1x256xi32>
    %14 = arith.cmpi slt, %1, %13 : vector<1x256xi32>
    %cst_4 = arith.constant 2.500000e-01 : f32
    %cst_5 = arith.constant 0.000000e+00 : f32
    %15 = vector.broadcast %cst_4 : f32 to vector<1x256xf32>
    %16 = vector.broadcast %cst_5 : f32 to vector<1x256xf32>
    %17 = arith.select %14, %15, %16 : vector<1x256xi1>, vector<1x256xf32>
    %c240_i32_6 = arith.constant 240 : i32
    %18 = tpu.dynamic_rotate %0 by %c240_i32_6 dim 1 : vector<8x256xf32>, i32 -> vector<8x256xf32>
    %19 = vector.broadcast %17 : vector<1x256xf32> to vector<8x256xf32>
    %20 = arith.mulf %18, %19 : vector<8x256xf32>
    %21 = arith.addf %12, %20 : vector<8x256xf32>
    %c16_i32 = arith.constant 16 : i32
    %22 = vector.broadcast %c16_i32 : i32 to vector<1x256xi32>
    %23 = arith.cmpi sge, %1, %22 : vector<1x256xi32>
    %cst_7 = arith.constant 2.500000e-01 : f32
    %cst_8 = arith.constant 0.000000e+00 : f32
    %24 = vector.broadcast %cst_7 : f32 to vector<1x256xf32>
    %25 = vector.broadcast %cst_8 : f32 to vector<1x256xf32>
    %26 = arith.select %23, %24, %25 : vector<1x256xi1>, vector<1x256xf32>
    %c16_i32_9 = arith.constant 16 : i32
    %27 = tpu.dynamic_rotate %0 by %c16_i32_9 dim 1 : vector<8x256xf32>, i32 -> vector<8x256xf32>
    %28 = vector.broadcast %26 : vector<1x256xf32> to vector<8x256xf32>
    %29 = arith.mulf %27, %28 : vector<8x256xf32>
    %30 = arith.addf %21, %29 : vector<8x256xf32>
    %c32_i32 = arith.constant 32 : i32
    %31 = vector.broadcast %c32_i32 : i32 to vector<1x256xi32>
    %32 = arith.cmpi sge, %1, %31 : vector<1x256xi32>
    %cst_10 = arith.constant 6.250000e-02 : f32
    %cst_11 = arith.constant 0.000000e+00 : f32
    %33 = vector.broadcast %cst_10 : f32 to vector<1x256xf32>
    %34 = vector.broadcast %cst_11 : f32 to vector<1x256xf32>
    %35 = arith.select %32, %33, %34 : vector<1x256xi1>, vector<1x256xf32>
    %c32_i32_12 = arith.constant 32 : i32
    %36 = tpu.dynamic_rotate %0 by %c32_i32_12 dim 1 : vector<8x256xf32>, i32 -> vector<8x256xf32>
    %37 = vector.broadcast %35 : vector<1x256xf32> to vector<8x256xf32>
    %38 = arith.mulf %36, %37 : vector<8x256xf32>
    %39 = arith.addf %30, %38 : vector<8x256xf32>
    %c0_13 = arith.constant 0 : index
    %c0_14 = arith.constant 0 : index
    %40 = vector.load %arg2[%c0_13, %c0_14] : memref<8x256xf32, #tpu.memory_space<vmem>>, vector<8x256xf32>
    tpu.vector_store %arg2[%c0_13, %c0_14], %39 {strides = array<i32>} : memref<8x256xf32, #tpu.memory_space<vmem>>, vector<8x256xf32>,
    return
  }
  func.func @transform_0(%arg0: i32) -> (i32, i32) {
    %c0_i32 = arith.constant 0 : i32
    %c0_i32_0 = arith.constant 0 : i32
    return %arg0, %c0_i32 : i32, i32
  }
  func.func @transform_1(%arg0: i32) -> (i32, i32) {
    %c0_i32 = arith.constant 0 : i32
    %c0_i32_0 = arith.constant 0 : i32
    return %arg0, %c0_i32 : i32, i32
  }
}

</mosaic_0001>

<llo_original>
// kernel: tpu_custom_call.1
$region0: #{tpu_custom_call.1}
  #allocation0 [shape = 'u32[]', space=smem, size = 0x4, offset = 0x4, fixed_abs, tag = 'smem constant byte address 0x4 - core index']
  #allocation1 [shape = 'u32[144,128]{1,0:T(1,128)}', space=vmem, size = 0x12000, scoped, tag = 'internal scratch']
  %s0 = inlined_call_operand.hbm [shape: f32[8,256], index: 0, kind: input, shape index: {}]
  %s1 = inlined_call_operand.hbm [shape: f32[8,256], index: 1, kind: output, shape index: {}]
  %s2 = sld [smem:[#allocation0]]
  $region18: #{tpu_custom_call.1} parent=0
    _
  %s4 = ssub.s32 1, %s2
  %s5 = scalar_select 0, %s4, %s2
  $region1: #{tpu_custom_call.1} parent=0
    #allocation2 [shape = 'u8[8192]{0}', space=vmem, size = 0x2000, scoped, tag = 'input window, operand 0, single buffered']
    #allocation3 [shape = 's32[1]{0}', space=sflag, size = 0x4, scoped, tag = 'scoped memory for tpu_custom_call.1']
    #allocation4 [shape = 's32[1]{0}', space=sflag, size = 0x4, scoped, tag = 'scoped memory for tpu_custom_call.1']
    #allocation5 [shape = 'u8[8192]{0}', space=vmem, size = 0x2000, scoped, tag = 'output window, operand 0, single buffered']
    %6 = vsyncpa [#allocation3], 0
    %7 = vsyncpa [#allocation4], 0
    // Predicated region
    $region2: #{tpu_custom_call.1} parent=1 // pred_check
      _
    $region3: #{tpu_custom_call.1} parent=1 // pred_check_branch
      %9 = sbr.rel (0) target = $region5
    $region4: #{tpu_custom_call.1} parent=1 // pred_region
      %s11 = ssub.s32 256, 256
      %12 = vsyncadd [#allocation3], %s11
      %s14 = sshll.u32 [#allocation2], 4
      %s15 = int_to_ptr.vmem [resolvable:$true] %s14
      %17 = dma.hbm_to_vmem [thread:$0]  %s0, 256, %s15, [#allocation3]
    $region5: #{tpu_custom_call.1} parent=1 // pred_fallthru
      _
    // Predicated region
    $region6: #{tpu_custom_call.1} parent=1 // pred_check
      _
    $region7: #{tpu_custom_call.1} parent=1 // pred_check_branch
      %19 = sbr.rel (0) target = $region9
    $region8: #{tpu_custom_call.1} parent=1 // pred_region
      %20 = dma.done [#allocation3], 256
    $region9: #{tpu_custom_call.1} parent=1 // pred_fallthru
      _
    %v21 = vld [vmem:[#allocation2] sm:$0xff]
    %v22 = vld [vmem:[#allocation2 + $0x8] sm:$0xff]
    %v23 = vlaneseq
    %v24 = vand.u32 %v23, 127
    %v25 = vadd.s32 %v24, 128
    %v26 = vmul.f32 %v21, 0.375
    %v27 = vmul.f32 %v22, 0.375
    %vm28 = vcmp.lt.s32.totalorder %v24, 224
    %vm29 = vcmp.lt.s32.totalorder %v25, 224
    %v30 = vsel %vm28, 0.0625, 0.0
    %v31 = vsel %vm29, 0.0625, 0.0
    %32 = vrot.lane.b32.xlu0 %v21, 96
    %v33 = vpop.permute.xlu0 %32
    %34 = vrot.lane.b32.xlu0 %v22, 96
    %v35 = vpop.permute.xlu0 %34
    %vm36 = vcmp.lt.s32.totalorder %v24, 96
    %v37 = vsel %vm36, %v33, %v35
    %v38 = vsel %vm36, %v35, %v33
    %v39 = vmul.f32 %v37, %v30
    %v40 = vmul.f32 %v38, %v31
    %v41 = vadd.f32 %v26, %v39
    %v42 = vadd.f32 %v27, %v40
    %vm43 = vcmp.lt.s32.totalorder %v24, 240
    %vm44 = vcmp.lt.s32.totalorder %v25, 240
    %v45 = vsel %vm43, 0.25, 0.0
    %v46 = vsel %vm44, 0.25, 0.0
    %47 = vrot.lane.b32.xlu0 %v21, 112
    %v48 = vpop.permute.xlu0 %47
    %49 = vrot.lane.b32.xlu0 %v22, 112
    %v50 = vpop.permute.xlu0 %49
    %vm51 = vcmp.lt.s32.totalorder %v24, 112
    %v52 = vsel %vm51, %v48, %v50
    %v53 = vsel %vm51, %v50, %v48
    %v54 = vmul.f32 %v52, %v45
    %v55 = vmul.f32 %v53, %v46
    %v56 = vadd.f32 %v41, %v54
    %v57 = vadd.f32 %v42, %v55
    %vm58 = vcmp.ge.s32.totalorder %v24, 16
    %vm59 = vcmp.ge.s32.totalorder %v25, 16
    %v60 = vsel %vm58, 0.25, 0.0
    %v61 = vsel %vm59, 0.25, 0.0
    %62 = vrot.lane.b32.xlu0 %v21, 16
    %v63 = vpop.permute.xlu0 %62
    %64 = vrot.lane.b32.xlu0 %v22, 16
    %v65 = vpop.permute.xlu0 %64
    %vm66 = vcmp.lt.s32.totalorder %v24, 16
    %v67 = vsel %vm66, %v63, %v65
    %v68 = vsel %vm66, %v65, %v63
    %v69 = vmul.f32 %v68, %v60
    %v70 = vmul.f32 %v67, %v61
    %v71 = vadd.f32 %v56, %v69
    %v72 = vadd.f32 %v57, %v70
    %vm73 = vcmp.ge.s32.totalorder %v24, 32
    %vm74 = vcmp.ge.s32.totalorder %v25, 32
    %v75 = vsel %vm73, 0.0625, 0.0
    %v76 = vsel %vm74, 0.0625, 0.0
    %77 = vrot.lane.b32.xlu0 %v21, 32
    %v78 = vpop.permute.xlu0 %77
    %79 = vrot.lane.b32.xlu0 %v22, 32
    %v80 = vpop.permute.xlu0 %79
    %vm81 = vcmp.lt.s32.totalorder %v24, 32
    %v82 = vsel %vm81, %v78, %v80
    %v83 = vsel %vm81, %v80, %v78
    %v84 = vmul.f32 %v83, %v75
    %v85 = vmul.f32 %v82, %v76
    %v86 = vadd.f32 %v71, %v84
    %v87 = vadd.f32 %v72, %v85
    %88 = vst [vmem:[#allocation5] sm:$0xff] %v86
    %89 = vst [vmem:[#allocation5 + $0x8] sm:$0xff] %v87
    // Predicated region
    $region10: #{tpu_custom_call.1} parent=1 // pred_check
      _
    $region11: #{tpu_custom_call.1} parent=1 // pred_check_branch
      %91 = sbr.rel (0) target = $region13
    $region12: #{tpu_custom_call.1} parent=1 // pred_region
      %s93 = ssub.s32 256, 256
      %94 = vsyncadd [#allocation4], %s93
      %s96 = sshll.u32 [#allocation5], 4
      %s97 = int_to_ptr.vmem [resolvable:$true] %s96
      %99 = dma.vmem_to_hbm [thread:$0]  %s97, 256, %s1, [#allocation4]
    $region13: #{tpu_custom_call.1} parent=1 // pred_fallthru
      _
    // Predicated region
    $region14: #{tpu_custom_call.1} parent=1 // pred_check
      _
    $region15: #{tpu_custom_call.1} parent=1 // pred_check_branch
      %101 = sbr.rel (0) target = $region17
    $region16: #{tpu_custom_call.1} parent=1 // pred_region
      %102 = dma.done [#allocation4], 256
    $region17: #{tpu_custom_call.1} parent=1 // pred_fallthru
      _
    %103 = vsyncpa [#allocation3], 1
    %104 = vsyncpa [#allocation4], 1

</llo_original>
